<compile_context>
chip_gen: v6e
topology: v6e:2x2x1
jax: 0.10.0
libtpu: 0.0.40
codegen_flags: <defaults>
</compile_context>

<pallas_src>
import math

import jax
import jax.numpy as jnp
from jax.experimental import pallas as pl
from jax.experimental.pallas import tpu as pltpu

N_POS = 18  # number of positional-encoding channels produced by the module

_TARGET_BLOCK_BYTES = 4 << 20    # ~4 MiB of in+out traffic per grid step
_MIN_GRID_STEPS_BYTES = 8 << 20  # problems above this should get >= 4 steps
_MIN_GRID_STEPS = 4
_VMEM_LIMIT_CAP = 48 << 20       # stay under v7x's 64 MiB physical VMEM


def _pos_slab(h, w, dtype):
    """(N_POS, H*W) positional channels; identical math to the PyTorch forward."""
    y = jnp.linspace(-1.0, 1.0, h, dtype=jnp.float32).reshape(h, 1)
    x = jnp.linspace(-1.0, 1.0, w, dtype=jnp.float32).reshape(1, w)
    y = jnp.broadcast_to(y, (h, w))
    x = jnp.broadcast_to(x, (h, w))
    r = jnp.sqrt(x * x + y * y)
    theta = jnp.arctan2(y, x)
    chans = []
    for f in (1.0, 2.0, 4.0, 8.0):
        chans.append(jnp.sin(r * math.pi * f))
        chans.append(jnp.cos(r * math.pi * f))
    for f in (1.0, 2.0, 4.0):
        chans.append(jnp.sin(theta * f))
        chans.append(jnp.cos(theta * f))
    chans += [jnp.sin(x * math.pi), jnp.cos(x * math.pi),
              jnp.sin(y * math.pi), jnp.cos(y * math.pi)]
    return jnp.stack(chans, axis=0).reshape(N_POS, h * w).astype(dtype)


def _concat_kernel(x_ref, pos_ref, o_ref):
    # x_ref: (Bt, C, tS), pos_ref: (N_POS, tS), o_ref: (Bt, C + N_POS, tS)
    bt, c, ts = x_ref.shape
    x = x_ref[...].astype(o_ref.dtype)
    # Batch-invariant positional channels, broadcast across the batch tile.
    # (Checked to stream into the store; blocks are kept modest so the
    # broadcast never needs a VMEM-materialized temp.)
    pos = jnp.broadcast_to(pos_ref[...].astype(o_ref.dtype)[None, :, :],
                           (bt, N_POS, ts))
    # Single full-block store: the x|pos sublane splice happens once
    # in-register; the store itself is full-width / unmasked.
    o_ref[...] = jnp.concatenate([x, pos], axis=1)


def _divisor_multiple_of(n, unit, at_most):
    """Largest multiple of `unit` that divides n and is <= at_most, else None."""
    t = min(n, at_most)
    t -= t % unit
    while t >= unit:
        if n % t == 0:
            return t
        t -= unit
    return None


def _pick_tiles(B, HW, row_bytes, lane_floor):
    """Choose (Bt, tS): ~_TARGET_BLOCK_BYTES of in+out traffic per step,
    lane-dense spatial tiles (>= lane_floor when splitting), batch tile shrunk
    before the spatial tile, and >= _MIN_GRID_STEPS steps on large problems."""
    total_bytes = B * HW * row_bytes
    lane_ok = (HW % 128 == 0)

    # Spatial tile: prefer the full flattened axis (longest DMA rows); only
    # split when even one batch element overshoots the per-step budget.
    if not lane_ok or HW * row_bytes <= _TARGET_BLOCK_BYTES:
        tS = HW
    else:
        cap = max(lane_floor, ((_TARGET_BLOCK_BYTES // row_bytes) // 128) * 128)
        tS = _divisor_multiple_of(HW, 128, cap) or HW

    # Batch tile: fill the remaining budget (shrink Bt before tS).
    Bt = int(max(1, min(B, _TARGET_BLOCK_BYTES // max(tS * row_bytes, 1))))
    while B % Bt != 0:
        Bt -= 1

    # Large problems: guarantee enough grid steps for megacore + DMA overlap.
    if total_bytes > _MIN_GRID_STEPS_BYTES:
        while (B // Bt) * (HW // tS) < _MIN_GRID_STEPS and Bt > 1:
            Bt -= 1
            while B % Bt != 0:
                Bt -= 1
        if (B // Bt) * (HW // tS) < _MIN_GRID_STEPS and lane_ok:
            need = -(-_MIN_GRID_STEPS // (B // Bt))   # spatial splits required
            cap = max(lane_floor, ((HW // need) // 128) * 128)
            new_tS = _divisor_multiple_of(HW, 128, cap)
            if new_tS is not None:
                tS = new_tS
    return Bt, tS


def sinusoidal_positional_encoding(x):
    """x: (B, C, H, W) -> (B, C + 18, H, W), matching the PyTorch module."""
    B, C, H, W = x.shape
    HW = H * W
    out_c = C + N_POS
    itemsize = jnp.dtype(x.dtype).itemsize

    # Batch-invariant positional slab; constant-folded when jitted.
    pos = _pos_slab(H, W, x.dtype)          # (N_POS, HW)
    x_flat = x.reshape(B, C, HW)            # free reshape, lane-dense minor dim

    lane_floor = 512 if itemsize >= 4 else 1024
    row_bytes = (C + out_c) * itemsize      # in+out bytes per spatial element per batch elem
    Bt, tS = _pick_tiles(B, HW, row_bytes, lane_floor)
    nB, nS = B // Bt, HW // tS

    # Double-buffered working set (x block + out block + pos block) + headroom,
    # capped so the same tiles compile on v7x's 64 MiB VMEM.
    block_bytes = (Bt * C * tS + Bt * out_c * tS + N_POS * tS) * itemsize
    vmem_limit = int(min(max(2 * block_bytes + (2 << 20), 8 << 20),
                         _VMEM_LIMIT_CAP))

    cost = pl.CostEstimate(
        flops=0, transcendentals=0,
        bytes_accessed=(B * C * HW + N_POS * HW + B * out_c * HW) * itemsize)

    out_flat = pl.pallas_call(
        _concat_kernel,
        out_shape=jax.ShapeDtypeStruct((B, out_c, HW), x.dtype),
        # Spatial axis outer, batch inner: the pos block index is unchanged
        # across the inner batch loop, so Pallas keeps it resident in VMEM.
        grid=(nS, nB),
        in_specs=[
            pl.BlockSpec((Bt, C, tS), lambda s, b: (b, 0, s)),
            pl.BlockSpec((N_POS, tS), lambda s, b: (0, s)),
        ],
        out_specs=pl.BlockSpec((Bt, out_c, tS), lambda s, b: (b, 0, s)),
        compiler_params=pltpu.CompilerParams(
            dimension_semantics=("parallel", "parallel"),
            vmem_limit_bytes=vmem_limit),
        cost_estimate=cost,
    )(x_flat, pos)

    return out_flat.reshape(B, out_c, H, W)


def _reference(x):
    """Pure-JAX reference mirroring the PyTorch forward exactly."""
    B, C, H, W = x.shape
    y_coords = jnp.broadcast_to(
        jnp.linspace(-1.0, 1.0, H, dtype=x.dtype).reshape(1, 1, H, 1), (B, 1, H, W))
    x_coords = jnp.broadcast_to(
        jnp.linspace(-1.0, 1.0, W, dtype=x.dtype).reshape(1, 1, 1, W), (B, 1, H, W))
    r = jnp.sqrt(x_coords ** 2 + y_coords ** 2)
    theta = jnp.arctan2(y_coords, x_coords)
    pos = []
    for f in (1, 2, 4, 8):
        pos.append(jnp.sin(r * math.pi * f))
        pos.append(jnp.cos(r * math.pi * f))
    for f in (1, 2, 4):
        pos.append(jnp.sin(theta * f))
        pos.append(jnp.cos(theta * f))
    pos.append(jnp.sin(x_coords * math.pi))
    pos.append(jnp.cos(x_coords * math.pi))
    pos.append(jnp.sin(y_coords * math.pi))
    pos.append(jnp.cos(y_coords * math.pi))
    return jnp.concatenate([x] + pos, axis=1)


if __name__ == "__main__":
    key = jax.random.PRNGKey(0)
    x = jax.random.normal(key, (2, 4, 16, 16), dtype=jnp.float32)

    fn = jax.jit(sinusoidal_positional_encoding)
    out = jax.block_until_ready(fn(x))
    ref = jax.block_until_ready(_reference(x))

    assert out.shape == (2, 4 + N_POS, 16, 16), out.shape
    assert jnp.allclose(out, ref, atol=1e-5), float(jnp.max(jnp.abs(out - ref)))
    print("KERNEL_OK")
</pallas_src>

<mosaic_0001>
module attributes {stable_mosaic.version = 11 : i64} {
  func.func @_concat_kernel(%arg0: i32, %arg1: i32, %arg2: memref<2x4x256xf32, #tpu.memory_space<vmem>>, %arg3: memref<18x256xf32, #tpu.memory_space<vmem>>, %arg4: memref<2x22x256xf32, #tpu.memory_space<vmem>>) attributes {dimension_semantics = [#tpu.dimension_semantics<parallel>, #tpu.dimension_semantics<parallel>], iteration_bounds = array<i64: 1, 1>, scalar_prefetch = 0 : i64, scratch_operands = 0 : i64, tpu.core_type = #tpu.core_type<tc>, window_params = [{transform_indices = @transform_0, window_bounds = array<i64: 2, 4, 256>}, {transform_indices = @transform_1, window_bounds = array<i64: 18, 256>}, {transform_indices = @transform_2, window_bounds = array<i64: 2, 22, 256>}]} {
    %c0 = arith.constant 0 : index
    %c0_0 = arith.constant 0 : index
    %c0_1 = arith.constant 0 : index
    %0 = vector.load %arg2[%c0, %c0_0, %c0_1] : memref<2x4x256xf32, #tpu.memory_space<vmem>>, vector<2x4x256xf32>
    %c0_2 = arith.constant 0 : index
    %c0_3 = arith.constant 0 : index
    %1 = vector.load %arg3[%c0_2, %c0_3] : memref<18x256xf32, #tpu.memory_space<vmem>>, vector<18x256xf32>
    %2 = vector.shape_cast %1 : vector<18x256xf32> to vector<1x18x256xf32>
    %3 = vector.shape_cast %2 : vector<1x18x256xf32> to vector<1x18x256xf32>
    %4 = vector.broadcast %3 : vector<1x18x256xf32> to vector<2x18x256xf32>
    %5 = tpu.concatenate %0, %4 in 1 : vector<2x4x256xf32>, vector<2x18x256xf32> -> vector<2x22x256xf32>
    %c0_4 = arith.constant 0 : index
    %c0_5 = arith.constant 0 : index
    %c0_6 = arith.constant 0 : index
    %6 = vector.load %arg4[%c0_4, %c0_5, %c0_6] : memref<2x22x256xf32, #tpu.memory_space<vmem>>, vector<2x22x256xf32>
    tpu.vector_store %arg4[%c0_4, %c0_5, %c0_6], %5 {strides = array<i32>} : memref<2x22x256xf32, #tpu.memory_space<vmem>>, vector<2x22x256xf32>,
    return
  }
  func.func @transform_0(%arg0: i32, %arg1: i32) -> (i32, i32, i32) {
    %c0_i32 = arith.constant 0 : i32
    %c0_i32_0 = arith.constant 0 : i32
    return %arg1, %c0_i32, %arg0 : i32, i32, i32
  }
  func.func @transform_1(%arg0: i32, %arg1: i32) -> (i32, i32) {
    %c0_i32 = arith.constant 0 : i32
    %c0_i32_0 = arith.constant 0 : i32
    return %c0_i32, %arg0 : i32, i32
  }
  func.func @transform_2(%arg0: i32, %arg1: i32) -> (i32, i32, i32) {
    %c0_i32 = arith.constant 0 : i32
    %c0_i32_0 = arith.constant 0 : i32
    return %arg1, %c0_i32, %arg0 : i32, i32, i32
  }
}

</mosaic_0001>

<llo_original>
// kernel: sinusoidal_positional_encoding.1
$region0: #{sinusoidal_positional_encoding.1}
  #allocation0 [shape = 'u32[]', space=smem, size = 0x4, offset = 0x4, fixed_abs, tag = 'smem constant byte address 0x4 - core index']
  #allocation1 [shape = 'u32[144,128]{1,0:T(1,128)}', space=vmem, size = 0x12000, scoped, tag = 'internal scratch']
  %s0 = inlined_call_operand.vmem [shape: f32[2,4,256], index: 0, kind: input, shape index: {}]
  %s1 = inlined_call_operand.vmem [shape: f32[18,256], index: 1, kind: input, shape index: {}]
  %s2 = inlined_call_operand.vmem [shape: f32[2,22,256], index: 2, kind: output, shape index: {}]
  %s3 = sld [smem:[#allocation0]]
  $region18: #{sinusoidal_positional_encoding.1} parent=0
    _
  %s5 = ssub.s32 1, %s3
  %s6 = scalar_select 0, %s5, %s3
  // Predicated region
  $region2: #{sinusoidal_positional_encoding.1} parent=0 // pred_check
    _
  $region3: #{sinusoidal_positional_encoding.1} parent=0 // pred_check_branch
    %8 = sbr.rel (0) target = $region5
  $region4: #{sinusoidal_positional_encoding.1} parent=0 // pred_region
    _
  $region5: #{sinusoidal_positional_encoding.1} parent=0 // pred_fallthru
    _
  // Predicated region
  $region6: #{sinusoidal_positional_encoding.1} parent=0 // pred_check
    _
  $region7: #{sinusoidal_positional_encoding.1} parent=0 // pred_check_branch
    %10 = sbr.rel (0) target = $region9
  $region8: #{sinusoidal_positional_encoding.1} parent=0 // pred_region
    _
  $region9: #{sinusoidal_positional_encoding.1} parent=0 // pred_fallthru
    _
  %v11 = vld [vmem:[%s0] sm:$0xff]
  %v12 = vld [vmem:[%s0 + $0x8] sm:$0xff]
  %v13 = vld [vmem:[%s1] sm:$0xff]
  %v14 = vld [vmem:[%s1 + $0x8] sm:$0xff]
  %v15 = vld [vmem:[%s1 + $0x10] sm:$0xff]
  %v16 = vld [vmem:[%s1 + $0x18] sm:$0xff]
  %v17 = vld [vmem:[%s1 + $0x20] sm:$0x3]
  %v18 = vld [vmem:[%s1 + $0x28] sm:$0x3]
  %v21 = vcombine.high %v11, %v11
  %v22 = vcombine.high %v12, %v12
  %vm31 = vcmask 1043456
  %v32 = vrot.slane %v13, 4
  %v33 = vrot.slane %v14, 4
  %v34 = vrot.slane %v15, 4
  %v35 = vsel %vm31, %v32, %v34
  %v36 = vrot.slane %v16, 4
  %v37 = vsel %vm31, %v33, %v36
  %v38 = vrot.slane %v17, 4
  %v39 = vsel %vm31, %v34, %v38
  %v40 = vrot.slane %v18, 4
  %v41 = vsel %vm31, %v36, %v40
  %v48 = vsel %vm31, %v11, %v32
  %v49 = vsel %vm31, %v21, %v33
  %v50 = vsel %vm31, %v12, %v32
  %v51 = vsel %vm31, %v22, %v33
  %52 = vst [vmem:[%s2] sm:$0xff] %v48
  %53 = vst [vmem:[%s2 + $0x8] sm:$0xff] %v49
  %54 = vst [vmem:[%s2 + $0x10] sm:$0xff] %v35
  %55 = vst [vmem:[%s2 + $0x18] sm:$0xff] %v37
  %56 = vst [vmem:[%s2 + $0x20] sm:$0x3f] %v39
  %57 = vst [vmem:[%s2 + $0x28] sm:$0x3f] %v41
  %58 = vst [vmem:[%s2 + $0x30] sm:$0xff] %v50
  %59 = vst [vmem:[%s2 + $0x38] sm:$0xff] %v51
  %60 = vst [vmem:[%s2 + $0x40] sm:$0xff] %v35
  %61 = vst [vmem:[%s2 + $0x48] sm:$0xff] %v37
  %62 = vst [vmem:[%s2 + $0x50] sm:$0x3f] %v39
  %63 = vst [vmem:[%s2 + $0x58] sm:$0x3f] %v41
  // Predicated region
  $region10: #{sinusoidal_positional_encoding.1} parent=0 // pred_check
    _
  $region11: #{sinusoidal_positional_encoding.1} parent=0 // pred_check_branch
    %65 = sbr.rel (0) target = $region13
  $region12: #{sinusoidal_positional_encoding.1} parent=0 // pred_region
    _
  $region13: #{sinusoidal_positional_encoding.1} parent=0 // pred_fallthru
    _
  // Predicated region
  $region14: #{sinusoidal_positional_encoding.1} parent=0 // pred_check
    _
  $region15: #{sinusoidal_positional_encoding.1} parent=0 // pred_check_branch
    %67 = sbr.rel (0) target = $region17
  $region16: #{sinusoidal_positional_encoding.1} parent=0 // pred_region
    _
  $region17: #{sinusoidal_positional_encoding.1} parent=0 // pred_fallthru
    _

</llo_original>
